<compile_context>
chip_gen: v5e
topology: v5e:2x2
jax: 0.10.0
libtpu: 0.0.40
codegen_flags: <defaults>
</compile_context>

<pallas_src>
import jax
import jax.numpy as jnp
from jax.experimental import pallas as pl
from jax.experimental.pallas import tpu as pltpu

_LANES = 128
_SUBLANES = 8
_MAX_TB = 4096                     # upper bound on batch rows per grid step
_HBM_TILE_TARGET = 4 * 2 ** 20     # ~4 MiB of HBM per grid step
_STRIP_F32_BUDGET = 16 * 1024      # live f32 slab elements per strip (~16 vregs)
_HOIST_A_LIMIT = 8 * 1024          # keep A in vregs when it fits in ~8 vregs


def _round_up(n, m):
    return -(-n // m) * m


def _vmem_budget_bytes():
    """Generation-aware (double-buffered input) budget and scoped-VMEM limit."""
    try:
        cap = int(pltpu.get_tpu_info().vmem_capacity_bytes)
    except Exception:
        cap = 64 * 2 ** 20         # conservative fallback (v7x-sized VMEM)
    budget = min(cap // 2, 48 * 2 ** 20)                 # for the input tiles
    vmem_limit = min(3 * cap // 4, budget + 16 * 2 ** 20)
    return budget, vmem_limit


def _pick_block_batch(B, L, itemsize, budget):
    """Batch tile: ~4 MiB of HBM per grid step, double-buffered under budget."""
    lpad = _round_up(L, _LANES)
    tb = min(budget // (2 * lpad * itemsize),            # default double buffering
             _HBM_TILE_TARGET // max(L * itemsize, 1),
             _MAX_TB)
    tb = max(_LANES, (int(tb) // _LANES) * _LANES)
    # Give both v7x TensorCores a grid step whenever the batch is big enough.
    if B >= 2 * _LANES:
        tb = min(tb, max(_LANES, _round_up(_round_up(B, 2) // 2, _LANES)))
    # Never tile past the (sublane-padded) batch.
    return int(min(tb, _round_up(B, _SUBLANES)))


def _pick_strip_rows(tb, lpad):
    """Largest power-of-two strip (<=128 rows) whose f32 slab stays ~16 vregs."""
    for cand in (128, 64, 32, 16, 8):
        if cand <= tb and tb % cand == 0 and cand * lpad <= _STRIP_F32_BUDGET:
            return cand
    return _SUBLANES


def _make_fm_kernel(reduce_sum, rows, hoist_a):
    def kernel(x_ref, a_ref, o_ref):
        n_strips = x_ref.shape[0] // rows
        a_hoisted = a_ref[...] if hoist_a else None      # loaded once per grid step

        @pl.loop(0, n_strips)
        def _(c):
            r0 = pl.multiple_of(c * rows, rows)
            a = a_hoisted if hoist_a else a_ref[...]
            # Lane-dense (rows, F*D) slab; f32 accumulation for the
            # cancellation-prone square_of_sum - sum_of_square.
            slab = x_ref[pl.ds(r0, rows), :].astype(jnp.float32)
            # Per-field sums on the MXU: s[r, d] = sum_f x[r, f, d].
            # TODO(synk): for very large embed_dim (multiple of 128) a direct
            # per-field slice-and-add would avoid the extra MXU flops.
            s = jnp.dot(slab, a, preferred_element_type=jnp.float32,
                        precision=jax.lax.Precision.HIGHEST)            # (rows, D)
            if reduce_sum:
                sum_sq = jnp.sum(slab * slab, axis=1, keepdims=True)    # (rows, 1)
                sq_sum = jnp.sum(s * s, axis=1, keepdims=True)          # (rows, 1)
                o_ref[pl.ds(r0, rows), :] = (0.5 * (sq_sum - sum_sq)).astype(o_ref.dtype)
            else:
                sq_fsum = jnp.dot(slab * slab, a,
                                  preferred_element_type=jnp.float32,
                                  precision=jax.lax.Precision.HIGHEST)  # (rows, D)
                o_ref[pl.ds(r0, rows), :] = (0.5 * (s * s - sq_fsum)).astype(o_ref.dtype)
    return kernel


def factorization_machine(x, reduce_sum=True, block_batch=None):
    """x: (B, F, D). Returns (B, 1) if reduce_sum else (B, D)."""
    B, F, D = x.shape
    L = F * D
    itemsize = jnp.dtype(x.dtype).itemsize

    # Collapse (F, D) -> L: free (contiguous trailing dims) and lane-dense.
    x2 = x.reshape(B, L)
    # Constant field-summing matrix: A[f*D + d, d'] = (d == d').
    a = jnp.tile(jnp.eye(D, dtype=jnp.float32), (F, 1))

    budget, vmem_limit = _vmem_budget_bytes()
    if block_batch is None:
        tb = _pick_block_batch(B, L, itemsize, budget)
    else:
        tb = max(_SUBLANES, (int(block_batch) // _SUBLANES) * _SUBLANES)
        tb = min(tb, _round_up(B, _SUBLANES))

    lpad = _round_up(L, _LANES)
    rows = _pick_strip_rows(tb, lpad)
    hoist_a = (L * D) <= _HOIST_A_LIMIT

    grid = (pl.cdiv(B, tb),)   # ragged tail handled by masked stores, no jnp.pad copy
    kernel = _make_fm_kernel(reduce_sum, rows, hoist_a)
    cp = pltpu.CompilerParams(dimension_semantics=("parallel",),
                              vmem_limit_bytes=int(vmem_limit))

    in_specs = [pl.BlockSpec((tb, L), lambda i: (i, 0)),
                pl.BlockSpec((L, D), lambda i: (0, 0))]   # constant index: fetched once

    if reduce_sum:
        out_shape = jax.ShapeDtypeStruct((B, 1), x.dtype)
        out_spec = pl.BlockSpec((tb, 1), lambda i: (i, 0))
    else:
        # TODO(synk): for D < 128 these stores are lane-sparse; a batch-on-lanes
        # (D, tb) output would fix it, but the wrapper-side transpose back costs
        # a full extra HBM round trip on the (already F-times-smaller) output.
        out_shape = jax.ShapeDtypeStruct((B, D), x.dtype)
        out_spec = pl.BlockSpec((tb, D), lambda i: (i, 0))

    return pl.pallas_call(
        kernel,
        out_shape=out_shape,
        grid=grid,
        in_specs=in_specs,
        out_specs=out_spec,
        compiler_params=cp,
    )(x2, a)


def _reference_fm(x, reduce_sum=True):
    x = x.astype(jnp.float32)
    square_of_sum = jnp.sum(x, axis=1) ** 2
    sum_of_square = jnp.sum(x ** 2, axis=1)
    ix = square_of_sum - sum_of_square
    if reduce_sum:
        ix = jnp.sum(ix, axis=1, keepdims=True)
    return 0.5 * ix


if __name__ == "__main__":
    key = jax.random.PRNGKey(0)
    B, F, D = 16, 8, 32                        # batch, num_fields, embed_dim
    x = jax.random.normal(key, (B, F, D), dtype=jnp.float32)

    # reduce_sum=True (module default)
    out = jax.block_until_ready(factorization_machine(x, reduce_sum=True))
    ref = _reference_fm(x, reduce_sum=True)
    assert out.shape == (B, 1)
    assert jnp.allclose(out, ref, atol=1e-4, rtol=1e-4)

    # reduce_sum=False path
    out2 = jax.block_until_ready(factorization_machine(x, reduce_sum=False))
    ref2 = _reference_fm(x, reduce_sum=False)
    assert out2.shape == (B, D)
    assert jnp.allclose(out2, ref2, atol=1e-4, rtol=1e-4)

    # Ragged batch: exercises grid=cdiv(B, tb), masked tail tile, multi-strip
    # pl.loop, and the two-grid-step (two TensorCore) split -- no input padding.
    B2 = 300
    x2 = jax.random.normal(jax.random.PRNGKey(1), (B2, F, D), dtype=jnp.float32)
    out3 = jax.block_until_ready(factorization_machine(x2, reduce_sum=True))
    ref3 = _reference_fm(x2, reduce_sum=True)
    assert out3.shape == (B2, 1)
    assert jnp.allclose(out3, ref3, atol=1e-4, rtol=1e-4)

    # Non-power-of-two field count and an embed_dim that is not 8/128-aligned.
    B3, F3, D3 = 300, 5, 24
    x3 = jax.random.normal(jax.random.PRNGKey(2), (B3, F3, D3), dtype=jnp.float32)
    out4 = jax.block_until_ready(factorization_machine(x3, reduce_sum=False))
    ref4 = _reference_fm(x3, reduce_sum=False)
    assert out4.shape == (B3, D3)
    assert jnp.allclose(out4, ref4, atol=1e-4, rtol=1e-4)

    print("KERNEL_OK")
</pallas_src>

<mosaic_0001>
module attributes {stable_mosaic.version = 11 : i64} {
  func.func @kernel(%arg0: i32, %arg1: memref<16x256xf32, #tpu.memory_space<vmem>>, %arg2: memref<256x32xf32, #tpu.memory_space<vmem>>, %arg3: memref<16x1xf32, #tpu.memory_space<vmem>>) attributes {dimension_semantics = [#tpu.dimension_semantics<parallel>], iteration_bounds = array<i64: 1>, scalar_prefetch = 0 : i64, scratch_operands = 0 : i64, tpu.core_type = #tpu.core_type<tc>, window_params = [{transform_indices = @transform_0, window_bounds = array<i64: 16, 256>}, {pipeline_mode = #tpu.pipeline_mode<synchronous>, transform_indices = @transform_1, window_bounds = array<i64: 256, 32>}, {transform_indices = @transform_2, window_bounds = array<i64: 16, 1>}]} {
    %c0 = arith.constant 0 : index
    %c0_0 = arith.constant 0 : index
    %0 = vector.load %arg2[%c0, %c0_0] : memref<256x32xf32, #tpu.memory_space<vmem>>, vector<256x32xf32>
    %c0_i32 = arith.constant 0 : i32
    %c1_i32 = arith.constant 1 : i32
    %1 = arith.muli %c0_i32, %c1_i32 : i32
    %c0_i32_1 = arith.constant 0 : i32
    %2 = arith.addi %c0_i32_1, %1 : i32
    %c16_i32 = arith.constant 16 : i32
    %3 = arith.muli %2, %c16_i32 : i32
    %4 = tpu.assume_multiple %3, 16 : i32
    %5 = arith.index_cast %4 : i32 to index
    %c0_2 = arith.constant 0 : index
    %6 = vector.load %arg1[%5, %c0_2] : memref<16x256xf32, #tpu.memory_space<vmem>>, vector<16x256xf32>
    %cst = arith.constant dense<0.000000e+00> : vector<16x32xf32>
    %7 = tpu.matmul %6, %0, %cst {dimension_numbers = #tpu.dot_dimension_numbers<[1], [0], [0], [1], [0, 0, 1, 1], [], []>, precision = #tpu.contract_precision<fp32>} : vector<16x256xf32>, vector<256x32xf32>, vector<16x32xf32> -> vector<16x32xf32>
    %8 = arith.mulf %6, %6 : vector<16x256xf32>
    %cst_3 = arith.constant dense<0.000000e+00> : vector<16xf32>
    %9 = vector.multi_reduction <add>, %8, %cst_3 [1] : vector<16x256xf32> to vector<16xf32>
    %10 = vector.shape_cast %9 : vector<16xf32> to vector<16x1xf32>
    %11 = arith.mulf %7, %7 : vector<16x32xf32>
    %cst_4 = arith.constant dense<0.000000e+00> : vector<16xf32>
    %12 = vector.multi_reduction <add>, %11, %cst_4 [1] : vector<16x32xf32> to vector<16xf32>
    %13 = vector.shape_cast %12 : vector<16xf32> to vector<16x1xf32>
    %14 = arith.subf %13, %10 : vector<16x1xf32>
    %cst_5 = arith.constant 5.000000e-01 : f32
    %15 = vector.broadcast %cst_5 : f32 to vector<16x1xf32>
    %16 = arith.mulf %15, %14 : vector<16x1xf32>
    %17 = arith.index_cast %4 : i32 to index
    %c0_6 = arith.constant 0 : index
    %18 = vector.load %arg3[%17, %c0_6] : memref<16x1xf32, #tpu.memory_space<vmem>>, vector<16x1xf32>
    tpu.vector_store %arg3[%17, %c0_6], %16 {strides = array<i32>} : memref<16x1xf32, #tpu.memory_space<vmem>>, vector<16x1xf32>,
    %c1_i32_7 = arith.constant 1 : i32
    return
  }
  func.func @transform_0(%arg0: i32) -> (i32, i32) {
    %c0_i32 = arith.constant 0 : i32
    %c0_i32_0 = arith.constant 0 : i32
    return %arg0, %c0_i32 : i32, i32
  }
  func.func @transform_1(%arg0: i32) -> (i32, i32) {
    %c0_i32 = arith.constant 0 : i32
    %c0_i32_0 = arith.constant 0 : i32
    %c0_i32_1 = arith.constant 0 : i32
    return %c0_i32, %c0_i32_0 : i32, i32
  }
  func.func @transform_2(%arg0: i32) -> (i32, i32) {
    %c0_i32 = arith.constant 0 : i32
    %c0_i32_0 = arith.constant 0 : i32
    return %arg0, %c0_i32 : i32, i32
  }
}

</mosaic_0001>

<llo_original>
// kernel: tpu_custom_call.1
$region0: #{tpu_custom_call.1}
  #allocation0 [shape = 'u32[]', space=smem, size = 0x4, offset = 0x4, fixed_abs, tag = 'smem constant byte address 0x4 - core index']
  #allocation1 [shape = 'u32[72,128]{1,0:T(1,128)}', space=vmem, size = 0x9000, scoped, tag = 'internal scratch']
  %s0 = inlined_call_operand.vmem [shape: f32[16,256], index: 0, kind: input, shape index: {}]
  %s1 = inlined_call_operand.vmem [shape: f32[256,32], index: 1, kind: input, shape index: {}]
  %s2 = inlined_call_operand.vmem [shape: f32[16,1], index: 2, kind: output, shape index: {}]
  %s3 = sld [smem:[#allocation0]]
  $region18: #{tpu_custom_call.1} parent=0
    _
  %s5 = ssub.s32 1, %s3
  %s6 = scalar_select 0, %s5, %s3
  // Predicated region
  $region2: #{tpu_custom_call.1} parent=0 // pred_check
    _
  $region3: #{tpu_custom_call.1} parent=0 // pred_check_branch
    %8 = sbr.rel (0) target = $region5
  $region4: #{tpu_custom_call.1} parent=0 // pred_region
    _
  $region5: #{tpu_custom_call.1} parent=0 // pred_fallthru
    _
  // Predicated region
  $region6: #{tpu_custom_call.1} parent=0 // pred_check
    _
  $region7: #{tpu_custom_call.1} parent=0 // pred_check_branch
    %10 = sbr.rel (0) target = $region9
  $region8: #{tpu_custom_call.1} parent=0 // pred_region
    _
  $region9: #{tpu_custom_call.1} parent=0 // pred_fallthru
    _
  %v11 = vld [vmem:[%s1] sm:$0xff]
  %v12 = vld [vmem:[%s1 + $0x8] sm:$0xff]
  %v13 = vld [vmem:[%s1 + $0x10] sm:$0xff]
  %v14 = vld [vmem:[%s1 + $0x18] sm:$0xff]
  %v15 = vld [vmem:[%s1 + $0x20] sm:$0xff]
  %v16 = vld [vmem:[%s1 + $0x28] sm:$0xff]
  %v17 = vld [vmem:[%s1 + $0x30] sm:$0xff]
  %v18 = vld [vmem:[%s1 + $0x38] sm:$0xff]
  %v19 = vld [vmem:[%s1 + $0x40] sm:$0xff]
  %v20 = vld [vmem:[%s1 + $0x48] sm:$0xff]
  %v21 = vld [vmem:[%s1 + $0x50] sm:$0xff]
  %v22 = vld [vmem:[%s1 + $0x58] sm:$0xff]
  %v23 = vld [vmem:[%s1 + $0x60] sm:$0xff]
  %v24 = vld [vmem:[%s1 + $0x68] sm:$0xff]
  %v25 = vld [vmem:[%s1 + $0x70] sm:$0xff]
  %v26 = vld [vmem:[%s1 + $0x78] sm:$0xff]
  %v27 = vld [vmem:[%s1 + $0x80] sm:$0xff]
  %v28 = vld [vmem:[%s1 + $0x88] sm:$0xff]
  %v29 = vld [vmem:[%s1 + $0x90] sm:$0xff]
  %v30 = vld [vmem:[%s1 + $0x98] sm:$0xff]
  %v31 = vld [vmem:[%s1 + $0xa0] sm:$0xff]
  %v32 = vld [vmem:[%s1 + $0xa8] sm:$0xff]
  %v33 = vld [vmem:[%s1 + $0xb0] sm:$0xff]
  %v34 = vld [vmem:[%s1 + $0xb8] sm:$0xff]
  %v35 = vld [vmem:[%s1 + $0xc0] sm:$0xff]
  %v36 = vld [vmem:[%s1 + $0xc8] sm:$0xff]
  %v37 = vld [vmem:[%s1 + $0xd0] sm:$0xff]
  %v38 = vld [vmem:[%s1 + $0xd8] sm:$0xff]
  %v39 = vld [vmem:[%s1 + $0xe0] sm:$0xff]
  %v40 = vld [vmem:[%s1 + $0xe8] sm:$0xff]
  %v41 = vld [vmem:[%s1 + $0xf0] sm:$0xff]
  %v42 = vld [vmem:[%s1 + $0xf8] sm:$0xff]
  %s43 = smul.u32 0, 2
  %s44 = smul.addr %s43, 8
  %s45 = scalar_lea.vmem %s0, %s44
  %v46 = vld [vmem:[%s45] sm:$0xff]
  %v47 = vld [vmem:[%s45 + $0x8] sm:$0xff]
  %v48 = vld [vmem:[%s45 + $0x10] sm:$0xff]
  %v49 = vld [vmem:[%s45 + $0x18] sm:$0xff]
  %v50 = vand.u32 %v26, 4294901760
  %51 = vmatpush.msra.mxu0 %v50
  %v52 = vand.u32 %v25, 4294901760
  %53 = vmatpush.msra.mxu0 %v52
  %v54 = vand.u32 %v24, 4294901760
  %55 = vmatpush.msra.mxu0 %v54
  %v56 = vand.u32 %v23, 4294901760
  %57 = vmatpush.msra.mxu0 %v56
  %v58 = vand.u32 %v22, 4294901760
  %59 = vmatpush.msra.mxu0 %v58
  %v60 = vand.u32 %v21, 4294901760
  %61 = vmatpush.msra.mxu0 %v60
  %v62 = vand.u32 %v20, 4294901760
  %63 = vmatpush.msra.mxu0 %v62
  %v64 = vand.u32 %v19, 4294901760
  %65 = vmatpush.msra.mxu0 %v64
  %v66 = vand.u32 %v18, 4294901760
  %67 = vmatpush.msra.mxu0 %v66
  %v68 = vand.u32 %v17, 4294901760
  %69 = vmatpush.msra.mxu0 %v68
  %v70 = vand.u32 %v16, 4294901760
  %71 = vmatpush.msra.mxu0 %v70
  %v72 = vand.u32 %v15, 4294901760
  %73 = vmatpush.msra.mxu0 %v72
  %v74 = vand.u32 %v14, 4294901760
  %75 = vmatpush.msra.mxu0 %v74
  %v76 = vand.u32 %v13, 4294901760
  %77 = vmatpush.msra.mxu0 %v76
  %v78 = vand.u32 %v12, 4294901760
  %79 = vmatpush.msra.mxu0 %v78
  %v80 = vand.u32 %v11, 4294901760
  %81 = vmatpush.msra.mxu0 %v80
  %v82 = vand.u32 %v46, 4294901760
  %v83 = vsub.f32 %v46, %v82
  %v84 = vand.u32 %v83, 4294901760
  %v85 = vsub.f32 %v83, %v84
  %v86 = vand.u32 %v85, 4294901760
  %87 = vmatmul.f32.gmra.mxu0 %v86
  %v88 = vpop.f32.mrf.mxu0
  %v89 = vadd.f32 0.0, %v88
  %v90 = vand.u32 %v48, 4294901760
  %v91 = vsub.f32 %v48, %v90
  %v92 = vand.u32 %v91, 4294901760
  %v93 = vsub.f32 %v91, %v92
  %v94 = vand.u32 %v93, 4294901760
  %95 = vmatmul.f32.gmra.mxu0 %v94
  %v96 = vpop.f32.mrf.mxu0
  %v97 = vadd.f32 0.0, %v96
  %98 = vdwg.mxu0
  %v99 = vand.u32 %v26, 4294901760
  %v100 = vsub.f32 %v26, %v99
  %v101 = vand.u32 %v100, 4294901760
  %v102 = vsub.f32 %v100, %v101
  %v103 = vand.u32 %v102, 4294901760
  %104 = vmatpush.msra.mxu0 %v103
  %v105 = vand.u32 %v25, 4294901760
  %v106 = vsub.f32 %v25, %v105
  %v107 = vand.u32 %v106, 4294901760
  %v108 = vsub.f32 %v106, %v107
  %v109 = vand.u32 %v108, 4294901760
  %110 = vmatpush.msra.mxu0 %v109
  %v111 = vand.u32 %v24, 4294901760
  %v112 = vsub.f32 %v24, %v111
  %v113 = vand.u32 %v112, 4294901760
  %v114 = vsub.f32 %v112, %v113
  %v115 = vand.u32 %v114, 4294901760
  %116 = vmatpush.msra.mxu0 %v115
  %v117 = vand.u32 %v23, 4294901760
  %v118 = vsub.f32 %v23, %v117
  %v119 = vand.u32 %v118, 4294901760
  %v120 = vsub.f32 %v118, %v119
  %v121 = vand.u32 %v120, 4294901760
  %122 = vmatpush.msra.mxu0 %v121
  %v123 = vand.u32 %v22, 4294901760
  %v124 = vsub.f32 %v22, %v123
  %v125 = vand.u32 %v124, 4294901760
  %v126 = vsub.f32 %v124, %v125
  %v127 = vand.u32 %v126, 4294901760
  %128 = vmatpush.msra.mxu0 %v127
  %v129 = vand.u32 %v21, 4294901760
  %v130 = vsub.f32 %v21, %v129
  %v131 = vand.u32 %v130, 4294901760
  %v132 = vsub.f32 %v130, %v131
  %v133 = vand.u32 %v132, 4294901760
  %134 = vmatpush.msra.mxu0 %v133
  %v135 = vand.u32 %v20, 4294901760
  %v136 = vsub.f32 %v20, %v135
  %v137 = vand.u32 %v136, 4294901760
  %v138 = vsub.f32 %v136, %v137
  %v139 = vand.u32 %v138, 4294901760
  %140 = vmatpush.msra.mxu0 %v139
  %v141 = vand.u32 %v19, 4294901760
  %v142 = vsub.f32 %v19, %v141
  %v143 = vand.u32 %v142, 4294901760
  %v144 = vsub.f32 %v142, %v143
  %v145 = vand.u32 %v144, 4294901760
  %146 = vmatpush.msra.mxu0 %v145
  %v147 = vand.u32 %v18, 4294901760
  %v148 = vsub.f32 %v18, %v147
  %v149 = vand.u32 %v148, 4294901760
  %v150 = vsub.f32 %v148, %v149
  %v151 = vand.u32 %v150, 4294901760
  %152 = vmatpush.msra.mxu0 %v151
  %v153 = vand.u32 %v17, 4294901760
  %v154 = vsub.f32 %v17, %v153
  %v155 = vand.u32 %v154, 4294901760
  %v156 = vsub.f32 %v154, %v155
  %v157 = vand.u32 %v156, 4294901760
  %158 = vmatpush.msra.mxu0 %v157
  %v159 = vand.u32 %v16, 4294901760
  %v160 = vsub.f32 %v16, %v159
  %v161 = vand.u32 %v160, 4294901760
  %v162 = vsub.f32 %v160, %v161
  %v163 = vand.u32 %v162, 4294901760
  %164 = vmatpush.msra.mxu0 %v163
  %v165 = vand.u32 %v15, 4294901760
  %v166 = vsub.f32 %v15, %v165
  %v167 = vand.u32 %v166, 4294901760
  %v168 = vsub.f32 %v166, %v167
  %v169 = vand.u32 %v168, 4294901760
  %170 = vmatpush.msra.mxu0 %v169
  %v171 = vand.u32 %v14, 4294901760
  %v172 = vsub.f32 %v14, %v171
  %v173 = vand.u32 %v172, 4294901760
  %v174 = vsub.f32 %v172, %v173
  %v175 = vand.u32 %v174, 4294901760
  %176 = vmatpush.msra.mxu0 %v175
  %v177 = vand.u32 %v13, 4294901760
  %v178 = vsub.f32 %v13, %v177
  %v179 = vand.u32 %v178, 4294901760
  %v180 = vsub.f32 %v178, %v179
  %v181 = vand.u32 %v180, 4294901760
  %182 = vmatpush.msra.mxu0 %v181
  %v183 = vand.u32 %v12, 4294901760
  %v184 = vsub.f32 %v12, %v183
  %v185 = vand.u32 %v184, 4294901760
  %v186 = vsub.f32 %v184, %v185
  %v187 = vand.u32 %v186, 4294901760
  %188 = vmatpush.msra.mxu0 %v187
  %v189 = vand.u32 %v11, 4294901760
  %v190 = vsub.f32 %v11, %v189
  %v191 = vand.u32 %v190, 4294901760
  %v192 = vsub.f32 %v190, %v191
  %v193 = vand.u32 %v192, 4294901760
  %194 = vmatpush.msra.mxu0 %v193
  %v195 = vand.u32 %v46, 4294901760
  %196 = vmatmul.f32.gmra.mxu0 %v195
  %v197 = vpop.f32.mrf.mxu0
  %v198 = vadd.f32 %v89, %v197
  %v199 = vand.u32 %v48, 4294901760
  %200 = vmatmul.f32.gmra.mxu0 %v199
  %v201 = vpop.f32.mrf.mxu0
  %v202 = vadd.f32 %v97, %v201
  %203 = vdwg.mxu0
  %v204 = vand.u32 %v26, 4294901760
  %v205 = vsub.f32 %v26, %v204
  %206 = vmatpush.msra.mxu0 %v205
  %v207 = vand.u32 %v25, 4294901760
  %v208 = vsub.f32 %v25, %v207
  %209 = vmatpush.msra.mxu0 %v208
  %v210 = vand.u32 %v24, 4294901760
  %v211 = vsub.f32 %v24, %v210
  %212 = vmatpush.msra.mxu0 %v211
  %v213 = vand.u32 %v23, 4294901760
  %v214 = vsub.f32 %v23, %v213
  %215 = vmatpush.msra.mxu0 %v214
  %v216 = vand.u32 %v22, 4294901760
  %v217 = vsub.f32 %v22, %v216
  %218 = vmatpush.msra.mxu0 %v217
  %v219 = vand.u32 %v21, 4294901760
  %v220 = vsub.f32 %v21, %v219
  %221 = vmatpush.msra.mxu0 %v220
  %v222 = vand.u32 %v20, 4294901760
  %v223 = vsub.f32 %v20, %v222
  %224 = vmatpush.msra.mxu0 %v223
  %v225 = vand.u32 %v19, 4294901760
  %v226 = vsub.f32 %v19, %v225
  %227 = vmatpush.msra.mxu0 %v226
  %v228 = vand.u32 %v18, 4294901760
  %v229 = vsub.f32 %v18, %v228
  %230 = vmatpush.msra.mxu0 %v229
  %v231 = vand.u32 %v17, 4294901760
  %v232 = vsub.f32 %v17, %v231
  %233 = vmatpush.msra.mxu0 %v232
  %v234 = vand.u32 %v16, 4294901760
  %v235 = vsub.f32 %v16, %v234
  %236 = vmatpush.msra.mxu0 %v235
  %v237 = vand.u32 %v15, 4294901760
  %v238 = vsub.f32 %v15, %v237
  %239 = vmatpush.msra.mxu0 %v238
  %v240 = vand.u32 %v14, 4294901760
  %v241 = vsub.f32 %v14, %v240
  %242 = vmatpush.msra.mxu0 %v241
  %v243 = vand.u32 %v13, 4294901760
  %v244 = vsub.f32 %v13, %v243
  %245 = vmatpush.msra.mxu0 %v244
  %v246 = vand.u32 %v12, 4294901760
  %v247 = vsub.f32 %v12, %v246
  %248 = vmatpush.msra.mxu0 %v247
  %v249 = vand.u32 %v11, 4294901760
  %v250 = vsub.f32 %v11, %v249
  %251 = vmatpush.msra.mxu0 %v250
  %v252 = vand.u32 %v46, 4294901760
  %v253 = vsub.f32 %v46, %v252
  %254 = vmatmul.f32.gmra.mxu0 %v253
  %v255 = vpop.f32.mrf.mxu0
  %v256 = vadd.f32 %v198, %v255
  %v257 = vand.u32 %v48, 4294901760
  %v258 = vsub.f32 %v48, %v257
  %259 = vmatmul.f32.gmra.mxu0 %v258
  %v260 = vpop.f32.mrf.mxu0
  %v261 = vadd.f32 %v202, %v260
  %262 = vdwg.mxu0
  %v263 = vand.u32 %v26, 4294901760
  %264 = vmatpush.msra.mxu0 %v263
  %v265 = vand.u32 %v25, 4294901760
  %266 = vmatpush.msra.mxu0 %v265
  %v267 = vand.u32 %v24, 4294901760
  %268 = vmatpush.msra.mxu0 %v267
  %v269 = vand.u32 %v23, 4294901760
  %270 = vmatpush.msra.mxu0 %v269
  %v271 = vand.u32 %v22, 4294901760
  %272 = vmatpush.msra.mxu0 %v271
  %v273 = vand.u32 %v21, 4294901760
  %274 = vmatpush.msra.mxu0 %v273
  %v275 = vand.u32 %v20, 4294901760
  %276 = vmatpush.msra.mxu0 %v275
  %v277 = vand.u32 %v19, 4294901760
  %278 = vmatpush.msra.mxu0 %v277
  %v279 = vand.u32 %v18, 4294901760
  %280 = vmatpush.msra.mxu0 %v279
  %v281 = vand.u32 %v17, 4294901760
  %282 = vmatpush.msra.mxu0 %v281
  %v283 = vand.u32 %v16, 4294901760
  %284 = vmatpush.msra.mxu0 %v283
  %v285 = vand.u32 %v15, 4294901760
  %286 = vmatpush.msra.mxu0 %v285
  %v287 = vand.u32 %v14, 4294901760
  %288 = vmatpush.msra.mxu0 %v287
  %v289 = vand.u32 %v13, 4294901760
  %290 = vmatpush.msra.mxu0 %v289
  %v291 = vand.u32 %v12, 4294901760
  %292 = vmatpush.msra.mxu0 %v291
  %v293 = vand.u32 %v11, 4294901760
  %294 = vmatpush.msra.mxu0 %v293
  %v295 = vand.u32 %v46, 4294901760
  %v296 = vsub.f32 %v46, %v295
  %v297 = vand.u32 %v296, 4294901760
  %298 = vmatmul.f32.gmra.mxu0 %v297
  %v299 = vpop.f32.mrf.mxu0
  %v300 = vadd.f32 %v256, %v299
  %v301 = vand.u32 %v48, 4294901760
  %v302 = vsub.f32 %v48, %v301
  %v303 = vand.u32 %v302, 4294901760
  %304 = vmatmul.f32.gmra.mxu0 %v303
  %v305 = vpop.f32.mrf.mxu0
  %v306 = vadd.f32 %v261, %v305
  %307 = vdwg.mxu0
  %v308 = vand.u32 %v26, 4294901760
  %v309 = vsub.f32 %v26, %v308
  %v310 = vand.u32 %v309, 4294901760
  %311 = vmatpush.msra.mxu0 %v310
  %v312 = vand.u32 %v25, 4294901760
  %v313 = vsub.f32 %v25, %v312
  %v314 = vand.u32 %v313, 4294901760
  %315 = vmatpush.msra.mxu0 %v314
  %v316 = vand.u32 %v24, 4294901760
  %v317 = vsub.f32 %v24, %v316
  %v318 = vand.u32 %v317, 4294901760
  %319 = vmatpush.msra.mxu0 %v318
  %v320 = vand.u32 %v23, 4294901760
  %v321 = vsub.f32 %v23, %v320
  %v322 = vand.u32 %v321, 4294901760
  %323 = vmatpush.msra.mxu0 %v322
  %v324 = vand.u32 %v22, 4294901760
  %v325 = vsub.f32 %v22, %v324
  %v326 = vand.u32 %v325, 4294901760
  %327 = vmatpush.msra.mxu0 %v326
  %v328 = vand.u32 %v21, 4294901760
  %v329 = vsub.f32 %v21, %v328
  %v330 = vand.u32 %v329, 4294901760
  %331 = vmatpush.msra.mxu0 %v330
  %v332 = vand.u32 %v20, 4294901760
  %v333 = vsub.f32 %v20, %v332
  %v334 = vand.u32 %v333, 4294901760
  %335 = vmatpush.msra.mxu0 %v334
  %v336 = vand.u32 %v19, 4294901760
  %v337 = vsub.f32 %v19, %v336
  %v338 = vand.u32 %v337, 4294901760
  %339 = vmatpush.msra.mxu0 %v338
  %v340 = vand.u32 %v18, 4294901760
  %v341 = vsub.f32 %v18, %v340
  %v342 = vand.u32 %v341, 4294901760
  %343 = vmatpush.msra.mxu0 %v342
  %v344 = vand.u32 %v17, 4294901760
  %v345 = vsub.f32 %v17, %v344
  %v346 = vand.u32 %v345, 4294901760
  %347 = vmatpush.msra.mxu0 %v346
  %v348 = vand.u32 %v16, 4294901760
  %v349 = vsub.f32 %v16, %v348
  %v350 = vand.u32 %v349, 4294901760
  %351 = vmatpush.msra.mxu0 %v350
  %v352 = vand.u32 %v15, 4294901760
  %v353 = vsub.f32 %v15, %v352
  %v354 = vand.u32 %v353, 4294901760
  %355 = vmatpush.msra.mxu0 %v354
  %v356 = vand.u32 %v14, 4294901760
  %v357 = vsub.f32 %v14, %v356
  %v358 = vand.u32 %v357, 4294901760
  %359 = vmatpush.msra.mxu0 %v358
  %v360 = vand.u32 %v13, 4294901760
  %v361 = vsub.f32 %v13, %v360
  %v362 = vand.u32 %v361, 4294901760
  %363 = vmatpush.msra.mxu0 %v362
  %v364 = vand.u32 %v12, 4294901760
  %v365 = vsub.f32 %v12, %v364
  %v366 = vand.u32 %v365, 4294901760
  %367 = vmatpush.msra.mxu0 %v366
  %v368 = vand.u32 %v11, 4294901760
  %v369 = vsub.f32 %v11, %v368
  %v370 = vand.u32 %v369, 4294901760
  %371 = vmatpush.msra.mxu0 %v370
  %v372 = vand.u32 %v46, 4294901760
  %373 = vmatmul.f32.gmra.mxu0 %v372
  %v374 = vpop.f32.mrf.mxu0
  %v375 = vadd.f32 %v300, %v374
  %v376 = vand.u32 %v48, 4294901760
  %377 = vmatmul.f32.gmra.mxu0 %v376
  %v378 = vpop.f32.mrf.mxu0
  %v379 = vadd.f32 %v306, %v378
  %380 = vdwg.mxu0
  %v381 = vand.u32 %v26, 4294901760
  %382 = vmatpush.msra.mxu0 %v381
  %v383 = vand.u32 %v25, 4294901760
  %384 = vmatpush.msra.mxu0 %v383
  %v385 = vand.u32 %v24, 4294901760
  %386 = vmatpush.msra.mxu0 %v385
  %v387 = vand.u32 %v23, 4294901760
  %388 = vmatpush.msra.mxu0 %v387
  %v389 = vand.u32 %v22, 4294901760
  %390 = vmatpush.msra.mxu0 %v389
  %v391 = vand.u32 %v21, 4294901760
  %392 = vmatpush.msra.mxu0 %v391
  %v393 = vand.u32 %v20, 4294901760
  %394 = vmatpush.msra.mxu0 %v393
  %v395 = vand.u32 %v19, 4294901760
  %396 = vmatpush.msra.mxu0 %v395
  %v397 = vand.u32 %v18, 4294901760
  %398 = vmatpush.msra.mxu0 %v397
  %v399 = vand.u32 %v17, 4294901760
  %400 = vmatpush.msra.mxu0 %v399
  %v401 = vand.u32 %v16, 4294901760
  %402 = vmatpush.msra.mxu0 %v401
  %v403 = vand.u32 %v15, 4294901760
  %404 = vmatpush.msra.mxu0 %v403
  %v405 = vand.u32 %v14, 4294901760
  %406 = vmatpush.msra.mxu0 %v405
  %v407 = vand.u32 %v13, 4294901760
  %408 = vmatpush.msra.mxu0 %v407
  %v409 = vand.u32 %v12, 4294901760
  %410 = vmatpush.msra.mxu0 %v409
  %v411 = vand.u32 %v11, 4294901760
  %412 = vmatpush.msra.mxu0 %v411
  %v413 = vand.u32 %v46, 4294901760
  %414 = vmatmul.f32.gmra.mxu0 %v413
  %v415 = vpop.f32.mrf.mxu0
  %v416 = vadd.f32 %v375, %v415
  %v417 = vand.u32 %v48, 4294901760
  %418 = vmatmul.f32.gmra.mxu0 %v417
  %v419 = vpop.f32.mrf.mxu0
  %v420 = vadd.f32 %v379, %v419
  %421 = vdwg.mxu0
  %v422 = vand.u32 %v42, 4294901760
  %423 = vmatpush.msra.mxu0 %v422
  %v424 = vand.u32 %v41, 4294901760
  %425 = vmatpush.msra.mxu0 %v424
  %v426 = vand.u32 %v40, 4294901760
  %427 = vmatpush.msra.mxu0 %v426
  %v428 = vand.u32 %v39, 4294901760
  %429 = vmatpush.msra.mxu0 %v428
  %v430 = vand.u32 %v38, 4294901760
  %431 = vmatpush.msra.mxu0 %v430
  %v432 = vand.u32 %v37, 4294901760
  %433 = vmatpush.msra.mxu0 %v432
  %v434 = vand.u32 %v36, 4294901760
  %435 = vmatpush.msra.mxu0 %v434
  %v436 = vand.u32 %v35, 4294901760
  %437 = vmatpush.msra.mxu0 %v436
  %v438 = vand.u32 %v34, 4294901760
  %439 = vmatpush.msra.mxu0 %v438
  %v440 = vand.u32 %v33, 4294901760
  %441 = vmatpush.msra.mxu0 %v440
  %v442 = vand.u32 %v32, 4294901760
  %443 = vmatpush.msra.mxu0 %v442
  %v444 = vand.u32 %v31, 4294901760
  %445 = vmatpush.msra.mxu0 %v444
  %v446 = vand.u32 %v30, 4294901760
  %447 = vmatpush.msra.mxu0 %v446
  %v448 = vand.u32 %v29, 4294901760
  %449 = vmatpush.msra.mxu0 %v448
  %v450 = vand.u32 %v28, 4294901760
  %451 = vmatpush.msra.mxu0 %v450
  %v452 = vand.u32 %v27, 4294901760
  %453 = vmatpush.msra.mxu0 %v452
  %v454 = vand.u32 %v47, 4294901760
  %v455 = vsub.f32 %v47, %v454
  %v456 = vand.u32 %v455, 4294901760
  %v457 = vsub.f32 %v455, %v456
  %v458 = vand.u32 %v457, 4294901760
  %459 = vmatmul.f32.gmra.mxu0 %v458
  %v460 = vpop.f32.mrf.mxu0
  %v461 = vadd.f32 %v416, %v460
  %v462 = vand.u32 %v49, 4294901760
  %v463 = vsub.f32 %v49, %v462
  %v464 = vand.u32 %v463, 4294901760
  %v465 = vsub.f32 %v463, %v464
  %v466 = vand.u32 %v465, 4294901760
  %467 = vmatmul.f32.gmra.mxu0 %v466
  %v468 = vpop.f32.mrf.mxu0
  %v469 = vadd.f32 %v420, %v468
  %470 = vdwg.mxu0
  %v471 = vand.u32 %v42, 4294901760
  %v472 = vsub.f32 %v42, %v471
  %v473 = vand.u32 %v472, 4294901760
  %v474 = vsub.f32 %v472, %v473
  %v475 = vand.u32 %v474, 4294901760
  %476 = vmatpush.msra.mxu0 %v475
  %v477 = vand.u32 %v41, 4294901760
  %v478 = vsub.f32 %v41, %v477
  %v479 = vand.u32 %v478, 4294901760
  %v480 = vsub.f32 %v478, %v479
  %v481 = vand.u32 %v480, 4294901760
  %482 = vmatpush.msra.mxu0 %v481
  %v483 = vand.u32 %v40, 4294901760
  %v484 = vsub.f32 %v40, %v483
  %v485 = vand.u32 %v484, 4294901760
  %v486 = vsub.f32 %v484, %v485
  %v487 = vand.u32 %v486, 4294901760
  %488 = vmatpush.msra.mxu0 %v487
  %v489 = vand.u32 %v39, 4294901760
  %v490 = vsub.f32 %v39, %v489
  %v491 = vand.u32 %v490, 4294901760
  %v492 = vsub.f32 %v490, %v491
  %v493 = vand.u32 %v492, 4294901760
  %494 = vmatpush.msra.mxu0 %v493
  %v495 = vand.u32 %v38, 4294901760
  %v496 = vsub.f32 %v38, %v495
  %v497 = vand.u32 %v496, 4294901760
  %v498 = vsub.f32 %v496, %v497
  %v499 = vand.u32 %v498, 4294901760
  %500 = vmatpush.msra.mxu0 %v499
  %v501 = vand.u32 %v37, 4294901760
  %v502 = vsub.f32 %v37, %v501
  %v503 = vand.u32 %v502, 4294901760
  %v504 = vsub.f32 %v502, %v503
  %v505 = vand.u32 %v504, 4294901760
  %506 = vmatpush.msra.mxu0 %v505
  %v507 = vand.u32 %v36, 4294901760
  %v508 = vsub.f32 %v36, %v507
  %v509 = vand.u32 %v508, 4294901760
  %v510 = vsub.f32 %v508, %v509
  %v511 = vand.u32 %v510, 4294901760
  %512 = vmatpush.msra.mxu0 %v511
  %v513 = vand.u32 %v35, 4294901760
  %v514 = vsub.f32 %v35, %v513
  %v515 = vand.u32 %v514, 4294901760
  %v516 = vsub.f32 %v514, %v515
  %v517 = vand.u32 %v516, 4294901760
  %518 = vmatpush.msra.mxu0 %v517
  %v519 = vand.u32 %v34, 4294901760
  %v520 = vsub.f32 %v34, %v519
  %v521 = vand.u32 %v520, 4294901760
  %v522 = vsub.f32 %v520, %v521
  %v523 = vand.u32 %v522, 4294901760
  %524 = vmatpush.msra.mxu0 %v523
  %v525 = vand.u32 %v33, 4294901760
  %v526 = vsub.f32 %v33, %v525
  %v527 = vand.u32 %v526, 4294901760
  %v528 = vsub.f32 %v526, %v527
  %v529 = vand.u32 %v528, 4294901760
  %530 = vmatpush.msra.mxu0 %v529
  %v531 = vand.u32 %v32, 4294901760
  %v532 = vsub.f32 %v32, %v531
  %v533 = vand.u32 %v532, 4294901760
  %v534 = vsub.f32 %v532, %v533
  %v535 = vand.u32 %v534, 4294901760
  %536 = vmatpush.msra.mxu0 %v535
  %v537 = vand.u32 %v31, 4294901760
  %v538 = vsub.f32 %v31, %v537
  %v539 = vand.u32 %v538, 4294901760
  %v540 = vsub.f32 %v538, %v539
  %v541 = vand.u32 %v540, 4294901760
  %542 = vmatpush.msra.mxu0 %v541
  %v543 = vand.u32 %v30, 4294901760
  %v544 = vsub.f32 %v30, %v543
  %v545 = vand.u32 %v544, 4294901760
  %v546 = vsub.f32 %v544, %v545
  %v547 = vand.u32 %v546, 4294901760
  %548 = vmatpush.msra.mxu0 %v547
  %v549 = vand.u32 %v29, 4294901760
  %v550 = vsub.f32 %v29, %v549
  %v551 = vand.u32 %v550, 4294901760
  %v552 = vsub.f32 %v550, %v551
  %v553 = vand.u32 %v552, 4294901760
  %554 = vmatpush.msra.mxu0 %v553
  %v555 = vand.u32 %v28, 4294901760
  %v556 = vsub.f32 %v28, %v555
  %v557 = vand.u32 %v556, 4294901760
  %v558 = vsub.f32 %v556, %v557
  %v559 = vand.u32 %v558, 4294901760
  %560 = vmatpush.msra.mxu0 %v559
  %v561 = vand.u32 %v27, 4294901760
  %v562 = vsub.f32 %v27, %v561
  %v563 = vand.u32 %v562, 4294901760
  %v564 = vsub.f32 %v562, %v563
  %v565 = vand.u32 %v564, 4294901760
  %566 = vmatpush.msra.mxu0 %v565
  %v567 = vand.u32 %v47, 4294901760
  %568 = vmatmul.f32.gmra.mxu0 %v567
  %v569 = vpop.f32.mrf.mxu0
  %v570 = vadd.f32 %v461, %v569
  %v571 = vand.u32 %v49, 4294901760
  %572 = vmatmul.f32.gmra.mxu0 %v571
  %v573 = vpop.f32.mrf.mxu0
  %v574 = vadd.f32 %v469, %v573
  %575 = vdwg.mxu0
  %v576 = vand.u32 %v42, 4294901760
  %v577 = vsub.f32 %v42, %v576
  %578 = vmatpush.msra.mxu0 %v577
  %v579 = vand.u32 %v41, 4294901760
  %v580 = vsub.f32 %v41, %v579
  %581 = vmatpush.msra.mxu0 %v580
  %v582 = vand.u32 %v40, 4294901760
  %v583 = vsub.f32 %v40, %v582
  %584 = vmatpush.msra.mxu0 %v583
  %v585 = vand.u32 %v39, 4294901760
  %v586 = vsub.f32 %v39, %v585
  %587 = vmatpush.msra.mxu0 %v586
  %v588 = vand.u32 %v38, 4294901760
  %v589 = vsub.f32 %v38, %v588
  %590 = vmatpush.msra.mxu0 %v589
  %v591 = vand.u32 %v37, 4294901760
  %v592 = vsub.f32 %v37, %v591
  %593 = vmatpush.msra.mxu0 %v592
  %v594 = vand.u32 %v36, 4294901760
  %v595 = vsub.f32 %v36, %v594
  %596 = vmatpush.msra.mxu0 %v595
  %v597 = vand.u32 %v35, 4294901760
  %v598 = vsub.f32 %v35, %v597
  %599 = vmatpush.msra.mxu0 %v598
  %v600 = vand.u32 %v34, 4294901760
  %v601 = vsub.f32 %v34, %v600
  %602 = vmatpush.msra.mxu0 %v601
  %v603 = vand.u32 %v33, 4294901760
  %v604 = vsub.f32 %v33, %v603
  %605 = vmatpush.msra.mxu0 %v604
  %v606 = vand.u32 %v32, 4294901760
  %v607 = vsub.f32 %v32, %v606
  %608 = vmatpush.msra.mxu0 %v607
  %v609 = vand.u32 %v31, 4294901760
  %v610 = vsub.f32 %v31, %v609
  %611 = vmatpush.msra.mxu0 %v610
  %v612 = vand.u32 %v30, 4294901760
  %v613 = vsub.f32 %v30, %v612
  %614 = vmatpush.msra.mxu0 %v613
  %v615 = vand.u32 %v29, 4294901760
  %v616 = vsub.f32 %v29, %v615
  %617 = vmatpush.msra.mxu0 %v616
  %v618 = vand.u32 %v28, 4294901760
  %v619 = vsub.f32 %v28, %v618
  %620 = vmatpush.msra.mxu0 %v619
  %v621 = vand.u32 %v27, 4294901760
  %v622 = vsub.f32 %v27, %v621
  %623 = vmatpush.msra.mxu0 %v622
  %v624 = vand.u32 %v47, 4294901760
  %v625 = vsub.f32 %v47, %v624
  %626 = vmatmul.f32.gmra.mxu0 %v625
  %v627 = vpop.f32.mrf.mxu0
  %v628 = vadd.f32 %v570, %v627
  %v629 = vand.u32 %v49, 4294901760
  %v630 = vsub.f32 %v49, %v629
  %631 = vmatmul.f32.gmra.mxu0 %v630
  %v632 = vpop.f32.mrf.mxu0
  %v633 = vadd.f32 %v574, %v632
  %634 = vdwg.mxu0
  %v635 = vand.u32 %v42, 4294901760
  %636 = vmatpush.msra.mxu0 %v635
  %v637 = vand.u32 %v41, 4294901760
  %638 = vmatpush.msra.mxu0 %v637
  %v639 = vand.u32 %v40, 4294901760
  %640 = vmatpush.msra.mxu0 %v639
  %v641 = vand.u32 %v39, 4294901760
  %642 = vmatpush.msra.mxu0 %v641
  %v643 = vand.u32 %v38, 4294901760
  %644 = vmatpush.msra.mxu0 %v643
  %v645 = vand.u32 %v37, 4294901760
  %646 = vmatpush.msra.mxu0 %v645
  %v647 = vand.u32 %v36, 4294901760
  %648 = vmatpush.msra.mxu0 %v647
  %v649 = vand.u32 %v35, 4294901760
  %650 = vmatpush.msra.mxu0 %v649
  %v651 = vand.u32 %v34, 4294901760
  %652 = vmatpush.msra.mxu0 %v651
  %v653 = vand.u32 %v33, 4294901760
  %654 = vmatpush.msra.mxu0 %v653
  %v655 = vand.u32 %v32, 4294901760
  %656 = vmatpush.msra.mxu0 %v655
  %v657 = vand.u32 %v31, 4294901760
  %658 = vmatpush.msra.mxu0 %v657
  %v659 = vand.u32 %v30, 4294901760
  %660 = vmatpush.msra.mxu0 %v659
  %v661 = vand.u32 %v29, 4294901760
  %662 = vmatpush.msra.mxu0 %v661
  %v663 = vand.u32 %v28, 4294901760
  %664 = vmatpush.msra.mxu0 %v663
  %v665 = vand.u32 %v27, 4294901760
  %666 = vmatpush.msra.mxu0 %v665
  %v667 = vand.u32 %v47, 4294901760
  %v668 = vsub.f32 %v47, %v667
  %v669 = vand.u32 %v668, 4294901760
  %670 = vmatmul.f32.gmra.mxu0 %v669
  %v671 = vpop.f32.mrf.mxu0
  %v672 = vadd.f32 %v628, %v671
  %v673 = vand.u32 %v49, 4294901760
  %v674 = vsub.f32 %v49, %v673
  %v675 = vand.u32 %v674, 4294901760
  %676 = vmatmul.f32.gmra.mxu0 %v675
  %v677 = vpop.f32.mrf.mxu0
  %v678 = vadd.f32 %v633, %v677
  %679 = vdwg.mxu0
  %v680 = vand.u32 %v42, 4294901760
  %v681 = vsub.f32 %v42, %v680
  %v682 = vand.u32 %v681, 4294901760
  %683 = vmatpush.msra.mxu0 %v682
  %v684 = vand.u32 %v41, 4294901760
  %v685 = vsub.f32 %v41, %v684
  %v686 = vand.u32 %v685, 4294901760
  %687 = vmatpush.msra.mxu0 %v686
  %v688 = vand.u32 %v40, 4294901760
  %v689 = vsub.f32 %v40, %v688
  %v690 = vand.u32 %v689, 4294901760
  %691 = vmatpush.msra.mxu0 %v690
  %v692 = vand.u32 %v39, 4294901760
  %v693 = vsub.f32 %v39, %v692
  %v694 = vand.u32 %v693, 4294901760
  %695 = vmatpush.msra.mxu0 %v694
  %v696 = vand.u32 %v38, 4294901760
  %v697 = vsub.f32 %v38, %v696
  %v698 = vand.u32 %v697, 4294901760
  %699 = vmatpush.msra.mxu0 %v698
  %v700 = vand.u32 %v37, 4294901760
  %v701 = vsub.f32 %v37, %v700
  %v702 = vand.u32 %v701, 4294901760
  %703 = vmatpush.msra.mxu0 %v702
  %v704 = vand.u32 %v36, 4294901760
  %v705 = vsub.f32 %v36, %v704
  %v706 = vand.u32 %v705, 4294901760
  %707 = vmatpush.msra.mxu0 %v706
  %v708 = vand.u32 %v35, 4294901760
  %v709 = vsub.f32 %v35, %v708
  %v710 = vand.u32 %v709, 4294901760
  %711 = vmatpush.msra.mxu0 %v710
  %v712 = vand.u32 %v34, 4294901760
  %v713 = vsub.f32 %v34, %v712
  %v714 = vand.u32 %v713, 4294901760
  %715 = vmatpush.msra.mxu0 %v714
  %v716 = vand.u32 %v33, 4294901760
  %v717 = vsub.f32 %v33, %v716
  %v718 = vand.u32 %v717, 4294901760
  %719 = vmatpush.msra.mxu0 %v718
  %v720 = vand.u32 %v32, 4294901760
  %v721 = vsub.f32 %v32, %v720
  %v722 = vand.u32 %v721, 4294901760
  %723 = vmatpush.msra.mxu0 %v722
  %v724 = vand.u32 %v31, 4294901760
  %v725 = vsub.f32 %v31, %v724
  %v726 = vand.u32 %v725, 4294901760
  %727 = vmatpush.msra.mxu0 %v726
  %v728 = vand.u32 %v30, 4294901760
  %v729 = vsub.f32 %v30, %v728
  %v730 = vand.u32 %v729, 4294901760
  %731 = vmatpush.msra.mxu0 %v730
  %v732 = vand.u32 %v29, 4294901760
  %v733 = vsub.f32 %v29, %v732
  %v734 = vand.u32 %v733, 4294901760
  %735 = vmatpush.msra.mxu0 %v734
  %v736 = vand.u32 %v28, 4294901760
  %v737 = vsub.f32 %v28, %v736
  %v738 = vand.u32 %v737, 4294901760
  %739 = vmatpush.msra.mxu0 %v738
  %v740 = vand.u32 %v27, 4294901760
  %v741 = vsub.f32 %v27, %v740
  %v742 = vand.u32 %v741, 4294901760
  %743 = vmatpush.msra.mxu0 %v742
  %v744 = vand.u32 %v47, 4294901760
  %745 = vmatmul.f32.gmra.mxu0 %v744
  %v746 = vpop.f32.mrf.mxu0
  %v747 = vadd.f32 %v672, %v746
  %v748 = vand.u32 %v49, 4294901760
  %749 = vmatmul.f32.gmra.mxu0 %v748
  %v750 = vpop.f32.mrf.mxu0
  %v751 = vadd.f32 %v678, %v750
  %752 = vdwg.mxu0
  %v753 = vand.u32 %v42, 4294901760
  %754 = vmatpush.msra.mxu0 %v753
  %v755 = vand.u32 %v41, 4294901760
  %756 = vmatpush.msra.mxu0 %v755
  %v757 = vand.u32 %v40, 4294901760
  %758 = vmatpush.msra.mxu0 %v757
  %v759 = vand.u32 %v39, 4294901760
  %760 = vmatpush.msra.mxu0 %v759
  %v761 = vand.u32 %v38, 4294901760
  %762 = vmatpush.msra.mxu0 %v761
  %v763 = vand.u32 %v37, 4294901760
  %764 = vmatpush.msra.mxu0 %v763
  %v765 = vand.u32 %v36, 4294901760
  %766 = vmatpush.msra.mxu0 %v765
  %v767 = vand.u32 %v35, 4294901760
  %768 = vmatpush.msra.mxu0 %v767
  %v769 = vand.u32 %v34, 4294901760
  %770 = vmatpush.msra.mxu0 %v769
  %v771 = vand.u32 %v33, 4294901760
  %772 = vmatpush.msra.mxu0 %v771
  %v773 = vand.u32 %v32, 4294901760
  %774 = vmatpush.msra.mxu0 %v773
  %v775 = vand.u32 %v31, 4294901760
  %776 = vmatpush.msra.mxu0 %v775
  %v777 = vand.u32 %v30, 4294901760
  %778 = vmatpush.msra.mxu0 %v777
  %v779 = vand.u32 %v29, 4294901760
  %780 = vmatpush.msra.mxu0 %v779
  %v781 = vand.u32 %v28, 4294901760
  %782 = vmatpush.msra.mxu0 %v781
  %v783 = vand.u32 %v27, 4294901760
  %784 = vmatpush.msra.mxu0 %v783
  %v785 = vand.u32 %v47, 4294901760
  %786 = vmatmul.f32.gmra.mxu0 %v785
  %v787 = vpop.f32.mrf.mxu0
  %v788 = vadd.f32 %v747, %v787
  %v789 = vand.u32 %v49, 4294901760
  %790 = vmatmul.f32.gmra.mxu0 %v789
  %v791 = vpop.f32.mrf.mxu0
  %v792 = vadd.f32 %v751, %v791
  %793 = vdwg.mxu0
  %v794 = vmul.f32 %v46, %v46
  %v795 = vmul.f32 %v47, %v47
  %v796 = vmul.f32 %v48, %v48
  %v797 = vmul.f32 %v49, %v49
  %v798 = vadd.f32 %v794, %v795
  %799 = vadd.xlane.f32.xlu0 %v798
  %v800 = vpop.xlane.xlu0 %799
  %v801 = vadd.f32 %v796, %v797
  %802 = vadd.xlane.f32.xlu0 %v801
  %v803 = vpop.xlane.xlu0 %802
  %v804 = vmul.f32 %v788, %v788
  %v805 = vmul.f32 %v792, %v792
  %vm806 = vcmask 261120
  %v807 = vsel %vm806, %v804, 0.0
  %808 = vadd.xlane.f32.xlu0 %v807
  %v809 = vpop.xlane.xlu0 %808
  %v810 = vsel %vm806, %v805, 0.0
  %811 = vadd.xlane.f32.xlu0 %v810
  %v812 = vpop.xlane.xlu0 %811
  %v813 = vsub.f32 %v809, %v800
  %v814 = vsub.f32 %v812, %v803
  %v815 = vmul.f32 %v813, 0.5
  %v816 = vmul.f32 %v814, 0.5
  %vm817 = vcmask 7168
  %818 = vst.msk [vmem:[%s2] sm:$0xff] %vm817, %v815
  %819 = vst.msk [vmem:[%s2 + $0x8] sm:$0xff] %vm817, %v816
  // Predicated region
  $region10: #{tpu_custom_call.1} parent=0 // pred_check
    _
  $region11: #{tpu_custom_call.1} parent=0 // pred_check_branch
    %821 = sbr.rel (0) target = $region13
  $region12: #{tpu_custom_call.1} parent=0 // pred_region
    _
  $region13: #{tpu_custom_call.1} parent=0 // pred_fallthru
    _
  // Predicated region
  $region14: #{tpu_custom_call.1} parent=0 // pred_check
    _
  $region15: #{tpu_custom_call.1} parent=0 // pred_check_branch
    %823 = sbr.rel (0) target = $region17
  $region16: #{tpu_custom_call.1} parent=0 // pred_region
    _
  $region17: #{tpu_custom_call.1} parent=0 // pred_fallthru
    _

</llo_original>
